<compile_context>
chip_gen: v5e
topology: v5e:2x2
jax: 0.10.0
libtpu: 0.0.40
codegen_flags: <defaults>
</compile_context>

<pallas_src>
import jax
import jax.numpy as jnp
from jax.experimental import pallas as pl
from jax.experimental.pallas import tpu as pltpu


NMAX = 128      # padded hidden/output width (lane-dense); must cover all layer N
MAX_TM = 2048   # max batch rows per grid step


def _mlp_kernel(x_ref, w0_ref, w_ref, b_ref, o_ref):
    """Fused MLP: [f32 exact-K matmul + bias + ReLU] + (NL-2) x [bf16 matmul +
    bias + ReLU] + final bf16 matmul + bias, emitted as a lane-dense row.

    x_ref : (TM, K0)              f32   raw input tile (unpadded feature width)
    w0_ref: (K0, NMAX)            f32   BN-folded layer-0 weight   (resident)
    w_ref : (NL-1, NMAX, NMAX)    bf16  BN-folded remaining weights (resident)
    b_ref : (NL, 1, NMAX)         f32   BN-folded biases            (resident)
    o_ref : (1, 1, TM)            f32   transposed, lane-dense predictions
    """
    nl_rest = w_ref.shape[0]

    # Layer 0: exact-K f32 matmul keeps raw inputs out of bf16.
    z = jnp.dot(x_ref[...], w0_ref[...], preferred_element_type=jnp.float32)
    z = z + b_ref[0]                                     # f32 bias add
    h = jnp.maximum(z, 0.0).astype(jnp.bfloat16)         # ReLU (f32 VPU) -> bf16

    # Hidden layers 1..NL-2 (unrolled at trace time).
    for l in range(nl_rest - 1):
        z = jnp.dot(h, w_ref[l], preferred_element_type=jnp.float32)
        z = z + b_ref[l + 1]
        h = jnp.maximum(z, 0.0).astype(jnp.bfloat16)

    # Final layer; only column 0 of the padded result is the prediction.
    out = jnp.dot(h, w_ref[nl_rest - 1], preferred_element_type=jnp.float32)
    out = out + b_ref[nl_rest]                           # (TM, NMAX) f32
    # XLU transpose -> (NMAX, TM); keep row 0 as a lane-dense (1, TM) row.
    out_t = out.T
    o_ref[...] = out_t[0:1, :][None, :, :]


def _choose_tm(batch, max_tm=MAX_TM):
    """Pick a tile size: as big as possible (amortize per-step overhead) while
    keeping >= 2 grid steps when the batch allows (v7x megacore)."""
    padded = ((batch + 127) // 128) * 128
    if padded <= 128:
        return padded
    half = max(128, (padded // 2 // 128) * 128)
    return min(max_tm, half)


def improved_housing_mlp_forward(x, w0, w_slab, b_slab, *, max_tm=MAX_TM):
    """x: (batch, in_features) f32; packed params from fold_and_pack_params.
    Returns (batch, 1) f32 predictions."""
    batch, in_features = x.shape
    k0, nmax = w0.shape
    nl_rest = w_slab.shape[0]
    nl = nl_rest + 1

    x = x.astype(jnp.float32)
    if in_features < k0:                      # pad features to sublane multiple (usually no-op)
        x = jnp.pad(x, ((0, 0), (0, k0 - in_features)))

    tm = _choose_tm(batch, max_tm)
    num_tiles = pl.cdiv(batch, tm)
    padded_batch = num_tiles * tm
    if padded_batch != batch:                 # pad rows only (narrow f32 array, cheap)
        x = jnp.pad(x, ((0, padded_batch - batch), (0, 0)))

    flops = 2 * padded_batch * (k0 * nmax + nl_rest * nmax * nmax)
    bytes_accessed = (x.size * 4 + w0.size * 4 + w_slab.size * 2
                      + b_slab.size * 4 + padded_batch * 4)

    out = pl.pallas_call(
        _mlp_kernel,
        out_shape=jax.ShapeDtypeStruct((num_tiles, 1, tm), jnp.float32),
        grid=(num_tiles,),
        in_specs=[
            pl.BlockSpec((tm, k0), lambda i: (i, 0)),                # activations stream
            pl.BlockSpec((k0, nmax), lambda i: (0, 0)),              # layer-0 weight resident
            pl.BlockSpec((nl_rest, nmax, nmax), lambda i: (0, 0, 0)),  # weight slab resident
            pl.BlockSpec((nl, 1, nmax), lambda i: (0, 0, 0)),        # bias slab resident
        ],
        out_specs=pl.BlockSpec((1, 1, tm), lambda i: (i, 0, 0)),     # lane-dense row per tile
        compiler_params=pltpu.CompilerParams(
            dimension_semantics=("parallel",)),                      # megacore on v7x
        cost_estimate=pl.CostEstimate(
            flops=flops, transcendentals=0, bytes_accessed=bytes_accessed),
    )(x, w0, w_slab, b_slab)

    return out.reshape(-1)[:batch].reshape(batch, 1)


def init_params(key, input_size, hidden_dims):
    """nn.Linear default init (U[-1/sqrt(in), 1/sqrt(in)]) + fresh-BN eval affine."""
    dims = [input_size] + list(hidden_dims) + [1]
    eps = 1e-5
    params = []
    for li in range(len(dims) - 1):
        fan_in, fan_out = dims[li], dims[li + 1]
        key, kw, kb = jax.random.split(key, 3)
        bound = 1.0 / jnp.sqrt(float(fan_in))
        # stored as [in, out] (transpose of PyTorch's [out, in])
        w = jax.random.uniform(kw, (fan_in, fan_out), jnp.float32, -bound, bound)
        b = jax.random.uniform(kb, (1, fan_out), jnp.float32, -bound, bound)
        params.extend([w, b])
        if li < len(hidden_dims):
            gamma = jnp.ones((1, fan_out), jnp.float32)
            beta = jnp.zeros((1, fan_out), jnp.float32)
            running_mean = jnp.zeros((1, fan_out), jnp.float32)
            running_var = jnp.ones((1, fan_out), jnp.float32)
            scale = gamma / jnp.sqrt(running_var + eps)
            shift = beta - running_mean * scale
            params.extend([scale, shift])
    return tuple(params)


def fold_and_pack_params(params, num_hidden, input_size, nmax=NMAX):
    """Fold the eval-mode BN affine into the Linear params, then pack:
       w0     : (K0, nmax)               f32  (K0 = input_size rounded up to 8)
       w_slab : (num_hidden, nmax, nmax) bf16 (layers 1..num_hidden, zero-padded)
       b_slab : (num_hidden+1, 1, nmax)  f32
    """
    p = list(params)
    Ws, Bs, Ss, Ts = [], [], [], []
    i = 0
    for _ in range(num_hidden):
        Ws.append(p[i]); Bs.append(p[i + 1]); Ss.append(p[i + 2]); Ts.append(p[i + 3])
        i += 4
    Ws.append(p[i]); Bs.append(p[i + 1])

    eff_w, eff_b = [], []
    carry_shift = None                    # post-ReLU BN shift from previous layer
    for l in range(num_hidden + 1):
        w, b = Ws[l], Bs[l]
        if carry_shift is not None:
            b = b + carry_shift @ w       # fold previous layer's BN shift
        if l < num_hidden:
            s, t = Ss[l], Ts[l]
            # ReLU(z)*s == ReLU(z*s) only if s > 0; guard against trained gamma <= 0.
            assert bool(jnp.all(s > 0)), "BN scale must be > 0 to fold through ReLU"
            w = w * s
            b = b * s
            carry_shift = t
        eff_w.append(w); eff_b.append(b)

    nl = num_hidden + 1
    k0 = ((input_size + 7) // 8) * 8
    n0 = eff_w[0].shape[1]
    assert n0 <= nmax, "layer width exceeds packed slab size"
    w0 = jnp.zeros((k0, nmax), jnp.float32).at[:input_size, :n0].set(eff_w[0])

    w_slab = jnp.zeros((nl - 1, nmax, nmax), jnp.float32)
    b_slab = jnp.zeros((nl, 1, nmax), jnp.float32)
    b_slab = b_slab.at[0, :, :n0].set(eff_b[0])
    for l in range(1, nl):
        k, n = eff_w[l].shape
        assert k <= nmax and n <= nmax, "layer width exceeds packed slab size"
        w_slab = w_slab.at[l - 1, :k, :n].set(eff_w[l])
        b_slab = b_slab.at[l, :, :n].set(eff_b[l])
    return w0, w_slab.astype(jnp.bfloat16), b_slab


def reference_forward_packed(x, w0, w_slab, b_slab):
    """Plain-JAX mirror of the kernel numerics (f32 first matmul, bf16 rest).
    (The f32 matmul precision mode may differ slightly between XLA and Mosaic.)"""
    k0 = w0.shape[0]
    xp = x.astype(jnp.float32)
    if xp.shape[1] < k0:
        xp = jnp.pad(xp, ((0, 0), (0, k0 - xp.shape[1])))
    z = jnp.dot(xp, w0, preferred_element_type=jnp.float32,
                precision=jax.lax.Precision.HIGHEST) + b_slab[0]
    h = jnp.maximum(z, 0.0).astype(jnp.bfloat16)
    nrest = w_slab.shape[0]
    for l in range(nrest - 1):
        z = jnp.dot(h, w_slab[l], preferred_element_type=jnp.float32) + b_slab[l + 1]
        h = jnp.maximum(z, 0.0).astype(jnp.bfloat16)
    out = jnp.dot(h, w_slab[nrest - 1], preferred_element_type=jnp.float32) + b_slab[nrest]
    return out[:, :1]


def reference_forward_semantic(x, params, num_hidden):
    """Full-precision eval-mode forward with the original (unfolded) BN affine."""
    p = list(params)
    h = x
    i = 0
    for _ in range(num_hidden):
        w, b, s, t = p[i], p[i + 1], p[i + 2], p[i + 3]
        i += 4
        h = jnp.maximum(h @ w + b, 0.0) * s + t
    w, b = p[i], p[i + 1]
    return h @ w + b


if __name__ == "__main__":
    batch = 256                      # 2 batch tiles of TM=128 -> exercises the grid
    input_size = 16
    hidden_dims = [128, 64, 32]      # small shapes consistent with the module

    key = jax.random.PRNGKey(0)
    key, kx = jax.random.split(key)
    x = jax.random.normal(kx, (batch, input_size), jnp.float32)
    params = init_params(key, input_size, hidden_dims)

    w0, w_slab, b_slab = fold_and_pack_params(params, len(hidden_dims), input_size)

    out = improved_housing_mlp_forward(x, w0, w_slab, b_slab)
    out = jax.block_until_ready(out)
    assert out.shape == (batch, 1)

    # Check vs. a plain-JAX mirror of the kernel's packed numerics.
    ref_packed = reference_forward_packed(x, w0, w_slab, b_slab)
    assert jnp.allclose(out, ref_packed, atol=2e-2, rtol=2e-2), \
        "mismatch vs packed JAX reference"

    # Semantic check vs. the f32, unfolded eval-mode forward (looser tolerance
    # only because hidden activations feed the MXU in bf16).
    ref_sem = reference_forward_semantic(x, params, len(hidden_dims))
    assert jnp.allclose(out, ref_sem, atol=5e-2, rtol=5e-2), \
        "mismatch vs f32 eval-mode reference"

    print("KERNEL_OK")
</pallas_src>

<mosaic_0001>
module attributes {stable_mosaic.version = 11 : i64} {
  func.func @_mlp_kernel(%arg0: i32, %arg1: memref<128x16xf32, #tpu.memory_space<vmem>>, %arg2: memref<16x128xf32, #tpu.memory_space<vmem>>, %arg3: memref<3x128x128xbf16, #tpu.memory_space<vmem>>, %arg4: memref<4x1x128xf32, #tpu.memory_space<vmem>>, %arg5: memref<1x1x128xf32, #tpu.memory_space<vmem>>) attributes {dimension_semantics = [#tpu.dimension_semantics<parallel>], iteration_bounds = array<i64: 2>, scalar_prefetch = 0 : i64, scratch_operands = 0 : i64, tpu.core_type = #tpu.core_type<tc>, window_params = [{transform_indices = @transform_0, window_bounds = array<i64: 128, 16>}, {pipeline_mode = #tpu.pipeline_mode<synchronous>, transform_indices = @transform_1, window_bounds = array<i64: 16, 128>}, {pipeline_mode = #tpu.pipeline_mode<synchronous>, transform_indices = @transform_2, window_bounds = array<i64: 3, 128, 128>}, {pipeline_mode = #tpu.pipeline_mode<synchronous>, transform_indices = @transform_3, window_bounds = array<i64: 4, 1, 128>}, {transform_indices = @transform_4, window_bounds = array<i64: 1, 1, 128>}]} {
    %c0 = arith.constant 0 : index
    %c0_0 = arith.constant 0 : index
    %0 = vector.load %arg1[%c0, %c0_0] : memref<128x16xf32, #tpu.memory_space<vmem>>, vector<128x16xf32>
    %c0_1 = arith.constant 0 : index
    %c0_2 = arith.constant 0 : index
    %1 = vector.load %arg2[%c0_1, %c0_2] : memref<16x128xf32, #tpu.memory_space<vmem>>, vector<16x128xf32>
    %cst = arith.constant dense<0.000000e+00> : vector<128x128xf32>
    %2 = tpu.matmul %0, %1, %cst {dimension_numbers = #tpu.dot_dimension_numbers<[1], [0], [0], [1], [0, 0, 1, 1], [], []>} : vector<128x16xf32>, vector<16x128xf32>, vector<128x128xf32> -> vector<128x128xf32>
    %c0_3 = arith.constant 0 : index
    %c0_4 = arith.constant 0 : index
    %c0_5 = arith.constant 0 : index
    %3 = vector.load %arg4[%c0_3, %c0_4, %c0_5] : memref<4x1x128xf32, #tpu.memory_space<vmem>>, vector<1x1x128xf32>
    %4 = vector.shape_cast %3 : vector<1x1x128xf32> to vector<1x128xf32>
    %5 = vector.broadcast %4 : vector<1x128xf32> to vector<128x128xf32>
    %6 = arith.addf %2, %5 : vector<128x128xf32>
    %cst_6 = arith.constant 0.000000e+00 : f32
    %7 = vector.broadcast %cst_6 : f32 to vector<128x128xf32>
    %8 = arith.maximumf %6, %7 : vector<128x128xf32>
    %9 = arith.truncf %8 : vector<128x128xf32> to vector<128x128xbf16>
    %c0_7 = arith.constant 0 : index
    %c0_8 = arith.constant 0 : index
    %c0_9 = arith.constant 0 : index
    %10 = vector.load %arg3[%c0_7, %c0_8, %c0_9] : memref<3x128x128xbf16, #tpu.memory_space<vmem>>, vector<1x128x128xbf16>
    %11 = vector.shape_cast %10 : vector<1x128x128xbf16> to vector<128x128xbf16>
    %cst_10 = arith.constant dense<0.000000e+00> : vector<128x128xf32>
    %12 = tpu.matmul %9, %11, %cst_10 {dimension_numbers = #tpu.dot_dimension_numbers<[1], [0], [0], [1], [0, 0, 1, 1], [], []>} : vector<128x128xbf16>, vector<128x128xbf16>, vector<128x128xf32> -> vector<128x128xf32>
    %c1 = arith.constant 1 : index
    %c0_11 = arith.constant 0 : index
    %c0_12 = arith.constant 0 : index
    %13 = vector.load %arg4[%c1, %c0_11, %c0_12] : memref<4x1x128xf32, #tpu.memory_space<vmem>>, vector<1x1x128xf32>
    %14 = vector.shape_cast %13 : vector<1x1x128xf32> to vector<1x128xf32>
    %15 = vector.broadcast %14 : vector<1x128xf32> to vector<128x128xf32>
    %16 = arith.addf %12, %15 : vector<128x128xf32>
    %cst_13 = arith.constant 0.000000e+00 : f32
    %17 = vector.broadcast %cst_13 : f32 to vector<128x128xf32>
    %18 = arith.maximumf %16, %17 : vector<128x128xf32>
    %19 = arith.truncf %18 : vector<128x128xf32> to vector<128x128xbf16>
    %c1_14 = arith.constant 1 : index
    %c0_15 = arith.constant 0 : index
    %c0_16 = arith.constant 0 : index
    %20 = vector.load %arg3[%c1_14, %c0_15, %c0_16] : memref<3x128x128xbf16, #tpu.memory_space<vmem>>, vector<1x128x128xbf16>
    %21 = vector.shape_cast %20 : vector<1x128x128xbf16> to vector<128x128xbf16>
    %cst_17 = arith.constant dense<0.000000e+00> : vector<128x128xf32>
    %22 = tpu.matmul %19, %21, %cst_17 {dimension_numbers = #tpu.dot_dimension_numbers<[1], [0], [0], [1], [0, 0, 1, 1], [], []>} : vector<128x128xbf16>, vector<128x128xbf16>, vector<128x128xf32> -> vector<128x128xf32>
    %c2 = arith.constant 2 : index
    %c0_18 = arith.constant 0 : index
    %c0_19 = arith.constant 0 : index
    %23 = vector.load %arg4[%c2, %c0_18, %c0_19] : memref<4x1x128xf32, #tpu.memory_space<vmem>>, vector<1x1x128xf32>
    %24 = vector.shape_cast %23 : vector<1x1x128xf32> to vector<1x128xf32>
    %25 = vector.broadcast %24 : vector<1x128xf32> to vector<128x128xf32>
    %26 = arith.addf %22, %25 : vector<128x128xf32>
    %cst_20 = arith.constant 0.000000e+00 : f32
    %27 = vector.broadcast %cst_20 : f32 to vector<128x128xf32>
    %28 = arith.maximumf %26, %27 : vector<128x128xf32>
    %29 = arith.truncf %28 : vector<128x128xf32> to vector<128x128xbf16>
    %c2_21 = arith.constant 2 : index
    %c0_22 = arith.constant 0 : index
    %c0_23 = arith.constant 0 : index
    %30 = vector.load %arg3[%c2_21, %c0_22, %c0_23] : memref<3x128x128xbf16, #tpu.memory_space<vmem>>, vector<1x128x128xbf16>
    %31 = vector.shape_cast %30 : vector<1x128x128xbf16> to vector<128x128xbf16>
    %cst_24 = arith.constant dense<0.000000e+00> : vector<128x128xf32>
    %32 = tpu.matmul %29, %31, %cst_24 {dimension_numbers = #tpu.dot_dimension_numbers<[1], [0], [0], [1], [0, 0, 1, 1], [], []>} : vector<128x128xbf16>, vector<128x128xbf16>, vector<128x128xf32> -> vector<128x128xf32>
    %c3 = arith.constant 3 : index
    %c0_25 = arith.constant 0 : index
    %c0_26 = arith.constant 0 : index
    %33 = vector.load %arg4[%c3, %c0_25, %c0_26] : memref<4x1x128xf32, #tpu.memory_space<vmem>>, vector<1x1x128xf32>
    %34 = vector.shape_cast %33 : vector<1x1x128xf32> to vector<1x128xf32>
    %35 = vector.broadcast %34 : vector<1x128xf32> to vector<128x128xf32>
    %36 = arith.addf %32, %35 : vector<128x128xf32>
    %37 = tpu.transpose %36, [1, 0] : vector<128x128xf32> -> vector<128x128xf32>
    %38 = vector.extract_strided_slice %37 {offsets = [0, 0], sizes = [1, 128], strides = [1, 1]} : vector<128x128xf32> to vector<1x128xf32>
    %39 = vector.shape_cast %38 : vector<1x128xf32> to vector<1x1x128xf32>
    %c0_27 = arith.constant 0 : index
    %c0_28 = arith.constant 0 : index
    %c0_29 = arith.constant 0 : index
    %40 = vector.load %arg5[%c0_27, %c0_28, %c0_29] : memref<1x1x128xf32, #tpu.memory_space<vmem>>, vector<1x1x128xf32>
    tpu.vector_store %arg5[%c0_27, %c0_28, %c0_29], %39 {strides = array<i32>} : memref<1x1x128xf32, #tpu.memory_space<vmem>>, vector<1x1x128xf32>,
    return
  }
  func.func @transform_0(%arg0: i32) -> (i32, i32) {
    %c0_i32 = arith.constant 0 : i32
    %c0_i32_0 = arith.constant 0 : i32
    return %arg0, %c0_i32 : i32, i32
  }
  func.func @transform_1(%arg0: i32) -> (i32, i32) {
    %c0_i32 = arith.constant 0 : i32
    %c0_i32_0 = arith.constant 0 : i32
    %c0_i32_1 = arith.constant 0 : i32
    return %c0_i32, %c0_i32_0 : i32, i32
  }
  func.func @transform_2(%arg0: i32) -> (i32, i32, i32) {
    %c0_i32 = arith.constant 0 : i32
    %c0_i32_0 = arith.constant 0 : i32
    %c0_i32_1 = arith.constant 0 : i32
    %c0_i32_2 = arith.constant 0 : i32
    return %c0_i32, %c0_i32_0, %c0_i32_1 : i32, i32, i32
  }
  func.func @transform_3(%arg0: i32) -> (i32, i32, i32) {
    %c0_i32 = arith.constant 0 : i32
    %c0_i32_0 = arith.constant 0 : i32
    %c0_i32_1 = arith.constant 0 : i32
    %c0_i32_2 = arith.constant 0 : i32
    return %c0_i32, %c0_i32_0, %c0_i32_1 : i32, i32, i32
  }
  func.func @transform_4(%arg0: i32) -> (i32, i32, i32) {
    %c0_i32 = arith.constant 0 : i32
    %c0_i32_0 = arith.constant 0 : i32
    %c0_i32_1 = arith.constant 0 : i32
    return %arg0, %c0_i32, %c0_i32_0 : i32, i32, i32
  }
}

</mosaic_0001>

<llo_original>
// kernel: tpu_custom_call.1
$region0: #{tpu_custom_call.1}
  #allocation0 [shape = 'u32[]', space=smem, size = 0x4, offset = 0x4, fixed_abs, tag = 'smem constant byte address 0x4 - core index']
  #allocation1 [shape = 'u32[72,128]{1,0:T(1,128)}', space=vmem, size = 0x9000, scoped, tag = 'internal scratch']
  %s0 = inlined_call_operand.vmem [shape: f32[256,16], index: 0, kind: input, shape index: {}]
  %s1 = inlined_call_operand.vmem [shape: f32[16,128], index: 1, kind: input, shape index: {}]
  %s2 = inlined_call_operand.vmem [shape: bf16[3,128,128], index: 2, kind: input, shape index: {}]
  %s3 = inlined_call_operand.vmem [shape: f32[4,1,128], index: 3, kind: input, shape index: {}]
  %s4 = inlined_call_operand.hbm [shape: f32[2,1,128], index: 4, kind: output, shape index: {}]
  %s5 = sld [smem:[#allocation0]]
  $region49: #{tpu_custom_call.1} parent=0
    _
  %s7 = ssub.s32 1, %s5
  %s8 = scalar_select 0, %s7, %s5
  $region1: #{tpu_custom_call.1} parent=0
    #allocation2 [shape = 'u8[1024]{0}', space=vmem, size = 0x400, scoped, tag = 'output window, operand 0']
    #allocation3 [shape = 's32[2]{0}', space=sflag, size = 0x8, scoped, tag = 'scoped memory for tpu_custom_call.1']
    %9 = vsyncpa [#allocation3], 0
    %s10 = scalar_lea.sflag [#allocation3], 1
    %11 = vsyncpa %s10, 0
    loop: start=0, step=1, limit=4
    $region2: #{tpu_custom_call.1} parent=1 // loop_pre_header
      _
    $region3: #{tpu_custom_call.1} parent=1 // loop_header
      %s13 = sphi 0, %s17
      %p14 = scmp.ge.s32.totalorder %s13, 4
      %s23 = sphi 0, %s25
      %s26 = sphi 0, %s23
      %s27 = sphi 0, %s26
      %s43 = sphi 0, %s27
      %s47 = sphi 0, %s47
      %s49 = sphi 0, %s47
      %s50 = sphi 0, %s49
      %s64 = sphi 0, %s50
      %s68 = sphi 0, %s68
      %s70 = sphi 0, %s68
      %s71 = sphi 0, %s70
      %s85 = sphi 0, %s71
      %s89 = sphi 0, %s89
      %s91 = sphi 0, %s89
      %s92 = sphi 0, %s91
      %s106 = sphi 0, %s92
      %s112 = sphi 0, %s114
      %s115 = sphi 0, %s112
      %s116 = sphi 0, %s115
      %s132 = sphi 0, %s116
    $region4: #{tpu_custom_call.1} parent=1 // loop_header_branch
      %16 = sbr.rel (%p14) target = $region8
    $region5: #{tpu_custom_call.1} parent=1 // loop_body
      %s18 = ssub.s32 %s13, 1
      %s19 = ssub.s32 %s13, 2
      %s20 = sadd.s32 %s13, 1
      %s21 = ssub.s32 %s13, %s20
      %p22 = scmp.eq.s32.totalorder %s21, 0
      %s24 = sadd.s32 %s23, 1
      %s25 = scalar_select %p22, %s23, %s24
      %p28 = pneg %p22
      %p29 = scmp.eq.s32.totalorder %s13, 1
      %p30 = por %p28, %p29
      %p31 = scmp.ne.s32.totalorder %s23, %s26
      %p32 = scmp.eq.s32.totalorder %s13, 0
      %p33 = por %p31, %p32
      %p34 = scmp.ne.s32.totalorder %s23, %s26
      %p35 = scmp.eq.s32.totalorder %s18, 1
      %p36 = por %p34, %p35
      %p37 = scmp.ne.s32.totalorder %s26, %s27
      %p38 = scmp.eq.s32.totalorder %s18, 0
      %p39 = por %p37, %p38
      %p40 = scmp.ne.s32.totalorder %s26, %s27
      %p41 = scmp.eq.s32.totalorder %s19, 1
      %p42 = por %p40, %p41
      %p44 = scmp.ne.s32.totalorder %s27, %s43
      %p45 = scmp.eq.s32.totalorder %s19, 0
      %p46 = por %p44, %p45
      %s48 = sadd.s32 %s47, 1
      %p51 = scmp.eq.s32.totalorder %s13, 1
      %p52 = scmp.ne.s32.totalorder %s47, %s49
      %p53 = scmp.eq.s32.totalorder %s13, 0
      %p54 = por %p52, %p53
      %p55 = scmp.ne.s32.totalorder %s47, %s49
      %p56 = scmp.eq.s32.totalorder %s18, 1
      %p57 = por %p55, %p56
      %p58 = scmp.ne.s32.totalorder %s49, %s50
      %p59 = scmp.eq.s32.totalorder %s18, 0
      %p60 = por %p58, %p59
      %p61 = scmp.ne.s32.totalorder %s49, %s50
      %p62 = scmp.eq.s32.totalorder %s19, 1
      %p63 = por %p61, %p62
      %p65 = scmp.ne.s32.totalorder %s50, %s64
      %p66 = scmp.eq.s32.totalorder %s19, 0
      %p67 = por %p65, %p66
      %s69 = sadd.s32 %s68, 1
      %p72 = scmp.eq.s32.totalorder %s13, 1
      %p73 = scmp.ne.s32.totalorder %s68, %s70
      %p74 = scmp.eq.s32.totalorder %s13, 0
      %p75 = por %p73, %p74
      %p76 = scmp.ne.s32.totalorder %s68, %s70
      %p77 = scmp.eq.s32.totalorder %s18, 1
      %p78 = por %p76, %p77
      %p79 = scmp.ne.s32.totalorder %s70, %s71
      %p80 = scmp.eq.s32.totalorder %s18, 0
      %p81 = por %p79, %p80
      %p82 = scmp.ne.s32.totalorder %s70, %s71
      %p83 = scmp.eq.s32.totalorder %s19, 1
      %p84 = por %p82, %p83
      %p86 = scmp.ne.s32.totalorder %s71, %s85
      %p87 = scmp.eq.s32.totalorder %s19, 0
      %p88 = por %p86, %p87
      %s90 = sadd.s32 %s89, 1
      %p93 = scmp.eq.s32.totalorder %s13, 1
      %p94 = scmp.ne.s32.totalorder %s89, %s91
      %p95 = scmp.eq.s32.totalorder %s13, 0
      %p96 = por %p94, %p95
      %p97 = scmp.ne.s32.totalorder %s89, %s91
      %p98 = scmp.eq.s32.totalorder %s18, 1
      %p99 = por %p97, %p98
      %p100 = scmp.ne.s32.totalorder %s91, %s92
      %p101 = scmp.eq.s32.totalorder %s18, 0
      %p102 = por %p100, %p101
      %p103 = scmp.ne.s32.totalorder %s91, %s92
      %p104 = scmp.eq.s32.totalorder %s19, 1
      %p105 = por %p103, %p104
      %p107 = scmp.ne.s32.totalorder %s92, %s106
      %p108 = scmp.eq.s32.totalorder %s19, 0
      %p109 = por %p107, %p108
      %s110 = ssub.s32 %s13, %s20
      %p111 = scmp.eq.s32.totalorder %s110, 0
      %s113 = sadd.s32 %s112, 1
      %s114 = scalar_select %p111, %s112, %s113
      %p117 = pneg %p111
      %p118 = scmp.eq.s32.totalorder %s13, 1
      %p119 = por %p117, %p118
      %p120 = scmp.ne.s32.totalorder %s112, %s115
      %p121 = scmp.eq.s32.totalorder %s13, 0
      %p122 = por %p120, %p121
      %p123 = scmp.ne.s32.totalorder %s112, %s115
      %p124 = scmp.eq.s32.totalorder %s18, 1
      %p125 = por %p123, %p124
      %p126 = scmp.ne.s32.totalorder %s115, %s116
      %p127 = scmp.eq.s32.totalorder %s18, 0
      %p128 = por %p126, %p127
      %p129 = scmp.ne.s32.totalorder %s115, %s116
      %p130 = scmp.eq.s32.totalorder %s19, 1
      %p131 = por %p129, %p130
      %p133 = scmp.ne.s32.totalorder %s116, %s132
      %p134 = scmp.eq.s32.totalorder %s19, 0
      %p135 = por %p133, %p134
      %p136 = scmp.le.s32.totalorder 1, %s13
      %p137 = scmp.lt.s32.totalorder %s13, 3
      %p138 = pnand %p136, %p137
      %p139 = pneg %p138
      // Predicated region
      $region9: #{tpu_custom_call.1} parent=5 // pred_check
        _
      $region10: #{tpu_custom_call.1} parent=5 // pred_check_branch
        %141 = sbr.rel (%p138) target = $region12
      $region11: #{tpu_custom_call.1} parent=5 // pred_region
        %s142 = ssub.s32 %s13, 1
        // Predicated region
        $region13: #{tpu_custom_call.1} parent=11 // pred_check
          %p143 = pneg %p60
        $region14: #{tpu_custom_call.1} parent=11 // pred_check_branch
          %145 = sbr.rel (%p143) target = $region16
        $region15: #{tpu_custom_call.1} parent=11 // pred_region
          _
        $region16: #{tpu_custom_call.1} parent=11 // pred_fallthru
          _
        // Predicated region
        $region17: #{tpu_custom_call.1} parent=11 // pred_check
          %p146 = pneg %p81
        $region18: #{tpu_custom_call.1} parent=11 // pred_check_branch
          %148 = sbr.rel (%p146) target = $region20
        $region19: #{tpu_custom_call.1} parent=11 // pred_region
          _
        $region20: #{tpu_custom_call.1} parent=11 // pred_fallthru
          _
        // Predicated region
        $region21: #{tpu_custom_call.1} parent=11 // pred_check
          %p149 = pneg %p102
        $region22: #{tpu_custom_call.1} parent=11 // pred_check_branch
          %151 = sbr.rel (%p149) target = $region24
        $region23: #{tpu_custom_call.1} parent=11 // pred_region
          _
        $region24: #{tpu_custom_call.1} parent=11 // pred_fallthru
          _
      $region12: #{tpu_custom_call.1} parent=5 // pred_fallthru
        _
      %p152 = scmp.lt.s32.totalorder %s13, 2
      // Predicated region
      $region25: #{tpu_custom_call.1} parent=5 // pred_check
        %p153 = pneg %p152
      $region26: #{tpu_custom_call.1} parent=5 // pred_check_branch
        %155 = sbr.rel (%p153) target = $region28
      $region27: #{tpu_custom_call.1} parent=5 // pred_region
        // Predicated region
        $region29: #{tpu_custom_call.1} parent=27 // pred_check
          %p156 = pneg %p33
        $region30: #{tpu_custom_call.1} parent=27 // pred_check_branch
          %158 = sbr.rel (%p156) target = $region32
        $region31: #{tpu_custom_call.1} parent=27 // pred_region
          %s159 = smul.u32 16, %s13
          %p160 = scmp.lt.s32.totalorder %s159, 31
          %s161 = scalar_select %p160, %s159, 31
          %s162 = smul.addr %s161, 8
          %s163 = scalar_lea.vmem %s0, %s162
          %s164 = smul.u32 16, %s13
        $region32: #{tpu_custom_call.1} parent=27 // pred_fallthru
          _
      $region28: #{tpu_custom_call.1} parent=5 // pred_fallthru
        _
      %p165 = scmp.le.s32.totalorder 1, %s13
      %p166 = scmp.lt.s32.totalorder %s13, 3
      %p167 = pnand %p165, %p166
      %p168 = pneg %p167
      // Predicated region
      $region33: #{tpu_custom_call.1} parent=5 // pred_check
        _
      $region34: #{tpu_custom_call.1} parent=5 // pred_check_branch
        %170 = sbr.rel (%p167) target = $region36
      $region35: #{tpu_custom_call.1} parent=5 // pred_region
        %s171 = ssub.s32 %s13, 1
        %s172 = smul.u32 16, %s18
        %p173 = scmp.lt.s32.totalorder %s172, 31
        %s174 = scalar_select %p173, %s172, 31
        %s175 = smul.addr %s174, 8
        %s176 = scalar_lea.vmem %s0, %s175
        %p177 = pneg %p39
        %p178 = pneg %p36
        %p179 = pneg %p60
        %p180 = pneg %p57
        %p181 = pneg %p81
        %p182 = pneg %p78
        %p183 = pneg %p102
        %p184 = pneg %p99
        %p185 = pneg %p128
        %p186 = pneg %p125
        %s187 = sand.u32 %s115, 1
        %s188 = scalar_lea.sflag [#allocation3], %s187
        %s189 = sand.u32 %s115, 1
        %s190 = scalar_lea.vmem [#allocation2], %s189
        %s191 = smul.u32 16, %s18
        %p192 = scmp.lt.s32.totalorder %s191, 31
        %s193 = scalar_select %p192, %s191, 31
        %s194 = smul.addr %s193, 8
        %s195 = scalar_lea.vmem %s0, %s194
        %s196 = smul.u32 16, %s18
        %v197 = vld [vmem:[%s195] sm:$0xff]
        %v198 = vld [vmem:[%s195 + $0x8] sm:$0xff]
        %v199 = vld [vmem:[%s195 + $0x10] sm:$0xff]
        %v200 = vld [vmem:[%s195 + $0x18] sm:$0xff]
        %v201 = vld [vmem:[%s195 + $0x20] sm:$0xff]
        %v202 = vld [vmem:[%s195 + $0x28] sm:$0xff]
        %v203 = vld [vmem:[%s195 + $0x30] sm:$0xff]
        %v204 = vld [vmem:[%s195 + $0x38] sm:$0xff]
        %v205 = vld [vmem:[%s195 + $0x40] sm:$0xff]
        %v206 = vld [vmem:[%s195 + $0x48] sm:$0xff]
        %v207 = vld [vmem:[%s195 + $0x50] sm:$0xff]
        %v208 = vld [vmem:[%s195 + $0x58] sm:$0xff]
        %v209 = vld [vmem:[%s195 + $0x60] sm:$0xff]
        %v210 = vld [vmem:[%s195 + $0x68] sm:$0xff]
        %v211 = vld [vmem:[%s195 + $0x70] sm:$0xff]
        %v212 = vld [vmem:[%s195 + $0x78] sm:$0xff]
        %v213 = vld [vmem:[%s1] sm:$0xff]
        %v214 = vld [vmem:[%s1 + $0x8] sm:$0xff]
        %v215 = vld [vmem:[%s3] sm:$0x1]
        %v217 = vperm.slane %v215, 0
        %vm219 = vcmask 130048
        %v221 = vsel %vm219, %v197, 0
        %v224 = vsel %vm219, %v198, 0
        %v227 = vsel %vm219, %v199, 0
        %v230 = vsel %vm219, %v200, 0
        %v233 = vsel %vm219, %v201, 0
        %v236 = vsel %vm219, %v202, 0
        %v239 = vsel %vm219, %v203, 0
        %v242 = vsel %vm219, %v204, 0
        %v245 = vsel %vm219, %v205, 0
        %v248 = vsel %vm219, %v206, 0
        %v251 = vsel %vm219, %v207, 0
        %v254 = vsel %vm219, %v208, 0
        %v257 = vsel %vm219, %v209, 0
        %v260 = vsel %vm219, %v210, 0
        %v263 = vsel %vm219, %v211, 0
        %v266 = vsel %vm219, %v212, 0
        %268 = vmatpush.msra.mxu0 0.0
        %269 = vmatpush.msra.mxu0 0.0
        %270 = vmatpush.msra.mxu0 0.0
        %271 = vmatpush.msra.mxu0 0.0
        %272 = vmatpush.msra.mxu0 0.0
        %273 = vmatpush.msra.mxu0 0.0
        %274 = vmatpush.msra.mxu0 0.0
        %275 = vmatpush.msra.mxu0 0.0
        %276 = vmatpush.msra.mxu0 0.0
        %277 = vmatpush.msra.mxu0 0.0
        %278 = vmatpush.msra.mxu0 0.0
        %279 = vmatpush.msra.mxu0 0.0
        %280 = vmatpush.msra.mxu0 0.0
        %281 = vmatpush.msra.mxu0 0.0
        %282 = vmatpush.msra.mxu0 %v214
        %283 = vmatpush.msra.mxu0 %v213
        %284 = vmatmul.f32.gmra.mxu0 %v221
        %v285 = vpop.f32.mrf.mxu0
        %v286 = vadd.f32 %v217, %v285
        %287 = vmatmul.f32.gmra.mxu0 %v224
        %v288 = vpop.f32.mrf.mxu0
        %v289 = vadd.f32 %v217, %v288
        %290 = vmatmul.f32.gmra.mxu0 %v227
        %v291 = vpop.f32.mrf.mxu0
        %v292 = vadd.f32 %v217, %v291
        %293 = vmatmul.f32.gmra.mxu0 %v230
        %v294 = vpop.f32.mrf.mxu0
        %v295 = vadd.f32 %v217, %v294
        %296 = vmatmul.f32.gmra.mxu0 %v233
        %v297 = vpop.f32.mrf.mxu0
        %v298 = vadd.f32 %v217, %v297
        %299 = vmatmul.f32.gmra.mxu0 %v236
        %v300 = vpop.f32.mrf.mxu0
        %v301 = vadd.f32 %v217, %v300
        %302 = vmatmul.f32.gmra.mxu0 %v239
        %v303 = vpop.f32.mrf.mxu0
        %v304 = vadd.f32 %v217, %v303
        %305 = vmatmul.f32.gmra.mxu0 %v242
        %v306 = vpop.f32.mrf.mxu0
        %v307 = vadd.f32 %v217, %v306
        %308 = vmatmul.f32.gmra.mxu0 %v245
        %v309 = vpop.f32.mrf.mxu0
        %v310 = vadd.f32 %v217, %v309
        %311 = vmatmul.f32.gmra.mxu0 %v248
        %v312 = vpop.f32.mrf.mxu0
        %v313 = vadd.f32 %v217, %v312
        %314 = vmatmul.f32.gmra.mxu0 %v251
        %v315 = vpop.f32.mrf.mxu0
        %v316 = vadd.f32 %v217, %v315
        %317 = vmatmul.f32.gmra.mxu0 %v254
        %v318 = vpop.f32.mrf.mxu0
        %v319 = vadd.f32 %v217, %v318
        %320 = vmatmul.f32.gmra.mxu0 %v257
        %v321 = vpop.f32.mrf.mxu0
        %v322 = vadd.f32 %v217, %v321
        %323 = vmatmul.f32.gmra.mxu0 %v260
        %v324 = vpop.f32.mrf.mxu0
        %v325 = vadd.f32 %v217, %v324
        %326 = vmatmul.f32.gmra.mxu0 %v263
        %v327 = vpop.f32.mrf.mxu0
        %v328 = vadd.f32 %v217, %v327
        %329 = vmatmul.f32.gmra.mxu0 %v266
        %v330 = vpop.f32.mrf.mxu0
        %v331 = vadd.f32 %v217, %v330
        %332 = vdwg.mxu0
        %v333 = vmax.f32 %v286, 0.0
        %v334 = vmax.f32 %v289, 0.0
        %v335 = vmax.f32 %v292, 0.0
        %v336 = vmax.f32 %v295, 0.0
        %v337 = vmax.f32 %v298, 0.0
        %v338 = vmax.f32 %v301, 0.0
        %v339 = vmax.f32 %v304, 0.0
        %v340 = vmax.f32 %v307, 0.0
        %v341 = vmax.f32 %v310, 0.0
        %v342 = vmax.f32 %v313, 0.0
        %v343 = vmax.f32 %v316, 0.0
        %v344 = vmax.f32 %v319, 0.0
        %v345 = vmax.f32 %v322, 0.0
        %v346 = vmax.f32 %v325, 0.0
        %v347 = vmax.f32 %v328, 0.0
        %v348 = vmax.f32 %v331, 0.0
        %v349 = vpack.c.bf16 %v334, %v333
        %v350 = vpack.c.bf16 %v336, %v335
        %v351 = vpack.c.bf16 %v338, %v337
        %v352 = vpack.c.bf16 %v340, %v339
        %v353 = vpack.c.bf16 %v342, %v341
        %v354 = vpack.c.bf16 %v344, %v343
        %v355 = vpack.c.bf16 %v346, %v345
        %v356 = vpack.c.bf16 %v348, %v347
        %v357 = vld [vmem:[%s2] sm:$0xf]
        %v358 = vld [vmem:[%s2 + $0x4] sm:$0xf]
        %v359 = vld [vmem:[%s2 + $0x8] sm:$0xf]
        %v360 = vld [vmem:[%s2 + $0xc] sm:$0xf]
        %v361 = vld [vmem:[%s2 + $0x10] sm:$0xf]
        %v362 = vld [vmem:[%s2 + $0x14] sm:$0xf]
        %v363 = vld [vmem:[%s2 + $0x18] sm:$0xf]
        %v364 = vld [vmem:[%s2 + $0x1c] sm:$0xf]
        %v365 = vld [vmem:[%s2 + $0x20] sm:$0xf]
        %v366 = vld [vmem:[%s2 + $0x24] sm:$0xf]
        %v367 = vld [vmem:[%s2 + $0x28] sm:$0xf]
        %v368 = vld [vmem:[%s2 + $0x2c] sm:$0xf]
        %v369 = vld [vmem:[%s2 + $0x30] sm:$0xf]
        %v370 = vld [vmem:[%s2 + $0x34] sm:$0xf]
        %v371 = vld [vmem:[%s2 + $0x38] sm:$0xf]
        %v372 = vld [vmem:[%s2 + $0x3c] sm:$0xf]
        %s373 = scalar_lea.vmem %s3, 1
        %v374 = vld [vmem:[%s373] sm:$0x1]
        %v376 = vperm.slane %v374, 0
        %v394 = vunpack.c.l.b16 %v357
        %v395 = vunpack.c.l.b16 %v358
        %v396 = vunpack.c.l.b16 %v359
        %v397 = vunpack.c.l.b16 %v360
        %v398 = vunpack.c.l.b16 %v361
        %v399 = vunpack.c.l.b16 %v362
        %v400 = vunpack.c.l.b16 %v363
        %v401 = vunpack.c.l.b16 %v364
        %v402 = vunpack.c.l.b16 %v365
        %v403 = vunpack.c.l.b16 %v366
        %v404 = vunpack.c.l.b16 %v367
        %v405 = vunpack.c.l.b16 %v368
        %v406 = vunpack.c.l.b16 %v369
        %v407 = vunpack.c.l.b16 %v370
        %v408 = vunpack.c.l.b16 %v371
        %v409 = vunpack.c.l.b16 %v372
        %v410 = vpack.c.b16 %v395, %v394
        %v411 = vpack.c.b16 %v397, %v396
        %v412 = vpack.c.b16 %v399, %v398
        %v413 = vpack.c.b16 %v401, %v400
        %v414 = vpack.c.b16 %v403, %v402
        %v415 = vpack.c.b16 %v405, %v404
        %v416 = vpack.c.b16 %v407, %v406
        %v417 = vpack.c.b16 %v409, %v408
        %426 = vmatpush.bf16.msra.mxu0 %v417
        %427 = vmatpush.bf16.msra.mxu0 %v416
        %428 = vmatpush.bf16.msra.mxu0 %v415
        %429 = vmatpush.bf16.msra.mxu0 %v414
        %430 = vmatpush.bf16.msra.mxu0 %v413
        %431 = vmatpush.bf16.msra.mxu0 %v412
        %432 = vmatpush.bf16.msra.mxu0 %v411
        %433 = vmatpush.bf16.msra.mxu0 %v410
        %434 = vmatmul.bf16.gmra.mxu0 %v349
        %v435 = vpop.f32.mrf.mxu0
        %v436 = vadd.f32 %v376, %v435
        %v437 = vpop.f32.mrf.mxu0
        %v438 = vadd.f32 %v376, %v437
        %439 = vmatmul.bf16.gmra.mxu0 %v350
        %v440 = vpop.f32.mrf.mxu0
        %v441 = vadd.f32 %v376, %v440
        %v442 = vpop.f32.mrf.mxu0
        %v443 = vadd.f32 %v376, %v442
        %444 = vmatmul.bf16.gmra.mxu0 %v351
        %v445 = vpop.f32.mrf.mxu0
        %v446 = vadd.f32 %v376, %v445
        %v447 = vpop.f32.mrf.mxu0
        %v448 = vadd.f32 %v376, %v447
        %449 = vmatmul.bf16.gmra.mxu0 %v352
        %v450 = vpop.f32.mrf.mxu0
        %v451 = vadd.f32 %v376, %v450
        %v452 = vpop.f32.mrf.mxu0
        %v453 = vadd.f32 %v376, %v452
        %454 = vmatmul.bf16.gmra.mxu0 %v353
        %v455 = vpop.f32.mrf.mxu0
        %v456 = vadd.f32 %v376, %v455
        %v457 = vpop.f32.mrf.mxu0
        %v458 = vadd.f32 %v376, %v457
        %459 = vmatmul.bf16.gmra.mxu0 %v354
        %v460 = vpop.f32.mrf.mxu0
        %v461 = vadd.f32 %v376, %v460
        %v462 = vpop.f32.mrf.mxu0
        %v463 = vadd.f32 %v376, %v462
        %464 = vmatmul.bf16.gmra.mxu0 %v355
        %v465 = vpop.f32.mrf.mxu0
        %v466 = vadd.f32 %v376, %v465
        %v467 = vpop.f32.mrf.mxu0
        %v468 = vadd.f32 %v376, %v467
        %469 = vmatmul.bf16.gmra.mxu0 %v356
        %v470 = vpop.f32.mrf.mxu0
        %v471 = vadd.f32 %v376, %v470
        %v472 = vpop.f32.mrf.mxu0
        %v473 = vadd.f32 %v376, %v472
        %474 = vdwg.mxu0
        %v475 = vmax.f32 %v436, 0.0
        %v476 = vmax.f32 %v438, 0.0
        %v477 = vmax.f32 %v441, 0.0
        %v478 = vmax.f32 %v443, 0.0
        %v479 = vmax.f32 %v446, 0.0
        %v480 = vmax.f32 %v448, 0.0
        %v481 = vmax.f32 %v451, 0.0
        %v482 = vmax.f32 %v453, 0.0
        %v483 = vmax.f32 %v456, 0.0
        %v484 = vmax.f32 %v458, 0.0
        %v485 = vmax.f32 %v461, 0.0
        %v486 = vmax.f32 %v463, 0.0
        %v487 = vmax.f32 %v466, 0.0
        %v488 = vmax.f32 %v468, 0.0
        %v489 = vmax.f32 %v471, 0.0
        %v490 = vmax.f32 %v473, 0.0
        %v491 = vpack.c.bf16 %v476, %v475
        %v492 = vpack.c.bf16 %v478, %v477
        %v493 = vpack.c.bf16 %v480, %v479
        %v494 = vpack.c.bf16 %v482, %v481
        %v495 = vpack.c.bf16 %v484, %v483
        %v496 = vpack.c.bf16 %v486, %v485
        %v497 = vpack.c.bf16 %v488, %v487
        %v498 = vpack.c.bf16 %v490, %v489
        %s499 = scalar_lea.vmem %s2, 64
        %v500 = vld [vmem:[%s499] sm:$0xf]
        %v501 = vld [vmem:[%s499 + $0x4] sm:$0xf]
        %v502 = vld [vmem:[%s499 + $0x8] sm:$0xf]
        %v503 = vld [vmem:[%s499 + $0xc] sm:$0xf]
        %v504 = vld [vmem:[%s499 + $0x10] sm:$0xf]
        %v505 = vld [vmem:[%s499 + $0x14] sm:$0xf]
        %v506 = vld [vmem:[%s499 + $0x18] sm:$0xf]
        %v507 = vld [vmem:[%s499 + $0x1c] sm:$0xf]
        %v508 = vld [vmem:[%s499 + $0x20] sm:$0xf]
        %v509 = vld [vmem:[%s499 + $0x24] sm:$0xf]
        %v510 = vld [vmem:[%s499 + $0x28] sm:$0xf]
        %v511 = vld [vmem:[%s499 + $0x2c] sm:$0xf]
        %v512 = vld [vmem:[%s499 + $0x30] sm:$0xf]
        %v513 = vld [vmem:[%s499 + $0x34] sm:$0xf]
        %v514 = vld [vmem:[%s499 + $0x38] sm:$0xf]
        %v515 = vld [vmem:[%s499 + $0x3c] sm:$0xf]
        %s516 = scalar_lea.vmem %s3, 2
        %v517 = vld [vmem:[%s516] sm:$0x1]
        %v519 = vperm.slane %v517, 0
        %v537 = vunpack.c.l.b16 %v500
        %v538 = vunpack.c.l.b16 %v501
        %v539 = vunpack.c.l.b16 %v502
        %v540 = vunpack.c.l.b16 %v503
        %v541 = vunpack.c.l.b16 %v504
        %v542 = vunpack.c.l.b16 %v505
        %v543 = vunpack.c.l.b16 %v506
        %v544 = vunpack.c.l.b16 %v507
        %v545 = vunpack.c.l.b16 %v508
        %v546 = vunpack.c.l.b16 %v509
        %v547 = vunpack.c.l.b16 %v510
        %v548 = vunpack.c.l.b16 %v511
        %v549 = vunpack.c.l.b16 %v512
        %v550 = vunpack.c.l.b16 %v513
        %v551 = vunpack.c.l.b16 %v514
        %v552 = vunpack.c.l.b16 %v515
        %v553 = vpack.c.b16 %v538, %v537
        %v554 = vpack.c.b16 %v540, %v539
        %v555 = vpack.c.b16 %v542, %v541
        %v556 = vpack.c.b16 %v544, %v543
        %v557 = vpack.c.b16 %v546, %v545
        %v558 = vpack.c.b16 %v548, %v547
        %v559 = vpack.c.b16 %v550, %v549
        %v560 = vpack.c.b16 %v552, %v551
        %569 = vmatpush.bf16.msra.mxu0 %v560
        %570 = vmatpush.bf16.msra.mxu0 %v559
        %571 = vmatpush.bf16.msra.mxu0 %v558
        %572 = vmatpush.bf16.msra.mxu0 %v557
        %573 = vmatpush.bf16.msra.mxu0 %v556
        %574 = vmatpush.bf16.msra.mxu0 %v555
        %575 = vmatpush.bf16.msra.mxu0 %v554
        %576 = vmatpush.bf16.msra.mxu0 %v553
        %577 = vmatmul.bf16.gmra.mxu0 %v491
        %v578 = vpop.f32.mrf.mxu0
        %v579 = vadd.f32 %v519, %v578
        %v580 = vpop.f32.mrf.mxu0
        %v581 = vadd.f32 %v519, %v580
        %582 = vmatmul.bf16.gmra.mxu0 %v492
        %v583 = vpop.f32.mrf.mxu0
        %v584 = vadd.f32 %v519, %v583
        %v585 = vpop.f32.mrf.mxu0
        %v586 = vadd.f32 %v519, %v585
        %587 = vmatmul.bf16.gmra.mxu0 %v493
        %v588 = vpop.f32.mrf.mxu0
        %v589 = vadd.f32 %v519, %v588
        %v590 = vpop.f32.mrf.mxu0
        %v591 = vadd.f32 %v519, %v590
        %592 = vmatmul.bf16.gmra.mxu0 %v494
        %v593 = vpop.f32.mrf.mxu0
        %v594 = vadd.f32 %v519, %v593
        %v595 = vpop.f32.mrf.mxu0
        %v596 = vadd.f32 %v519, %v595
        %597 = vmatmul.bf16.gmra.mxu0 %v495
        %v598 = vpop.f32.mrf.mxu0
        %v599 = vadd.f32 %v519, %v598
        %v600 = vpop.f32.mrf.mxu0
        %v601 = vadd.f32 %v519, %v600
        %602 = vmatmul.bf16.gmra.mxu0 %v496
        %v603 = vpop.f32.mrf.mxu0
        %v604 = vadd.f32 %v519, %v603
        %v605 = vpop.f32.mrf.mxu0
        %v606 = vadd.f32 %v519, %v605
        %607 = vmatmul.bf16.gmra.mxu0 %v497
        %v608 = vpop.f32.mrf.mxu0
        %v609 = vadd.f32 %v519, %v608
        %v610 = vpop.f32.mrf.mxu0
        %v611 = vadd.f32 %v519, %v610
        %612 = vmatmul.bf16.gmra.mxu0 %v498
        %v613 = vpop.f32.mrf.mxu0
        %v614 = vadd.f32 %v519, %v613
        %v615 = vpop.f32.mrf.mxu0
        %v616 = vadd.f32 %v519, %v615
        %617 = vdwg.mxu0
        %v618 = vmax.f32 %v579, 0.0
        %v619 = vmax.f32 %v581, 0.0
        %v620 = vmax.f32 %v584, 0.0
        %v621 = vmax.f32 %v586, 0.0
        %v622 = vmax.f32 %v589, 0.0
        %v623 = vmax.f32 %v591, 0.0
        %v624 = vmax.f32 %v594, 0.0
        %v625 = vmax.f32 %v596, 0.0
        %v626 = vmax.f32 %v599, 0.0
        %v627 = vmax.f32 %v601, 0.0
        %v628 = vmax.f32 %v604, 0.0
        %v629 = vmax.f32 %v606, 0.0
        %v630 = vmax.f32 %v609, 0.0
        %v631 = vmax.f32 %v611, 0.0
        %v632 = vmax.f32 %v614, 0.0
        %v633 = vmax.f32 %v616, 0.0
        %v634 = vpack.c.bf16 %v619, %v618
        %v635 = vpack.c.bf16 %v621, %v620
        %v636 = vpack.c.bf16 %v623, %v622
        %v637 = vpack.c.bf16 %v625, %v624
        %v638 = vpack.c.bf16 %v627, %v626
        %v639 = vpack.c.bf16 %v629, %v628
        %v640 = vpack.c.bf16 %v631, %v630
        %v641 = vpack.c.bf16 %v633, %v632
        %s642 = scalar_lea.vmem %s2, 128
        %v643 = vld [vmem:[%s642] sm:$0xf]
        %v644 = vld [vmem:[%s642 + $0x4] sm:$0xf]
        %v645 = vld [vmem:[%s642 + $0x8] sm:$0xf]
        %v646 = vld [vmem:[%s642 + $0xc] sm:$0xf]
        %v647 = vld [vmem:[%s642 + $0x10] sm:$0xf]
        %v648 = vld [vmem:[%s642 + $0x14] sm:$0xf]
        %v649 = vld [vmem:[%s642 + $0x18] sm:$0xf]
        %v650 = vld [vmem:[%s642 + $0x1c] sm:$0xf]
        %v651 = vld [vmem:[%s642 + $0x20] sm:$0xf]
        %v652 = vld [vmem:[%s642 + $0x24] sm:$0xf]
        %v653 = vld [vmem:[%s642 + $0x28] sm:$0xf]
        %v654 = vld [vmem:[%s642 + $0x2c] sm:$0xf]
        %v655 = vld [vmem:[%s642 + $0x30] sm:$0xf]
        %v656 = vld [vmem:[%s642 + $0x34] sm:$0xf]
        %v657 = vld [vmem:[%s642 + $0x38] sm:$0xf]
        %v658 = vld [vmem:[%s642 + $0x3c] sm:$0xf]
        %s659 = scalar_lea.vmem %s3, 3
        %v660 = vld [vmem:[%s659] sm:$0x1]
        %v662 = vperm.slane %v660, 0
        %v680 = vunpack.c.l.b16 %v643
        %v681 = vunpack.c.l.b16 %v644
        %v682 = vunpack.c.l.b16 %v645
        %v683 = vunpack.c.l.b16 %v646
        %v684 = vunpack.c.l.b16 %v647
        %v685 = vunpack.c.l.b16 %v648
        %v686 = vunpack.c.l.b16 %v649
        %v687 = vunpack.c.l.b16 %v650
        %v688 = vunpack.c.l.b16 %v651
        %v689 = vunpack.c.l.b16 %v652
        %v690 = vunpack.c.l.b16 %v653
        %v691 = vunpack.c.l.b16 %v654
        %v692 = vunpack.c.l.b16 %v655
        %v693 = vunpack.c.l.b16 %v656
        %v694 = vunpack.c.l.b16 %v657
        %v695 = vunpack.c.l.b16 %v658
        %v696 = vpack.c.b16 %v681, %v680
        %v697 = vpack.c.b16 %v683, %v682
        %v698 = vpack.c.b16 %v685, %v684
        %v699 = vpack.c.b16 %v687, %v686
        %v700 = vpack.c.b16 %v689, %v688
        %v701 = vpack.c.b16 %v691, %v690
        %v702 = vpack.c.b16 %v693, %v692
        %v703 = vpack.c.b16 %v695, %v694
        %712 = vmatpush.bf16.msra.mxu0 %v703
        %713 = vmatpush.bf16.msra.mxu0 %v702
        %714 = vmatpush.bf16.msra.mxu0 %v701
        %715 = vmatpush.bf16.msra.mxu0 %v700
        %716 = vmatpush.bf16.msra.mxu0 %v699
        %717 = vmatpush.bf16.msra.mxu0 %v698
        %718 = vmatpush.bf16.msra.mxu0 %v697
        %719 = vmatpush.bf16.msra.mxu0 %v696
        %720 = vmatmul.bf16.gmra.mxu0 %v634
        %v721 = vpop.f32.mrf.mxu0
        %v722 = vadd.f32 %v662, %v721
        %v723 = vpop.f32.mrf.mxu0
        %v724 = vadd.f32 %v662, %v723
        %725 = vmatmul.bf16.gmra.mxu0 %v635
        %v726 = vpop.f32.mrf.mxu0
        %v727 = vadd.f32 %v662, %v726
        %v728 = vpop.f32.mrf.mxu0
        %v729 = vadd.f32 %v662, %v728
        %730 = vmatmul.bf16.gmra.mxu0 %v636
        %v731 = vpop.f32.mrf.mxu0
        %v732 = vadd.f32 %v662, %v731
        %v733 = vpop.f32.mrf.mxu0
        %v734 = vadd.f32 %v662, %v733
        %735 = vmatmul.bf16.gmra.mxu0 %v637
        %v736 = vpop.f32.mrf.mxu0
        %v737 = vadd.f32 %v662, %v736
        %v738 = vpop.f32.mrf.mxu0
        %v739 = vadd.f32 %v662, %v738
        %740 = vmatmul.bf16.gmra.mxu0 %v638
        %v741 = vpop.f32.mrf.mxu0
        %v742 = vadd.f32 %v662, %v741
        %v743 = vpop.f32.mrf.mxu0
        %v744 = vadd.f32 %v662, %v743
        %745 = vmatmul.bf16.gmra.mxu0 %v639
        %v746 = vpop.f32.mrf.mxu0
        %v747 = vadd.f32 %v662, %v746
        %v748 = vpop.f32.mrf.mxu0
        %v749 = vadd.f32 %v662, %v748
        %750 = vmatmul.bf16.gmra.mxu0 %v640
        %v751 = vpop.f32.mrf.mxu0
        %v752 = vadd.f32 %v662, %v751
        %v753 = vpop.f32.mrf.mxu0
        %v754 = vadd.f32 %v662, %v753
        %755 = vmatmul.bf16.gmra.mxu0 %v641
        %v756 = vpop.f32.mrf.mxu0
        %v757 = vadd.f32 %v662, %v756
        %v758 = vpop.f32.mrf.mxu0
        %v759 = vadd.f32 %v662, %v758
        %760 = vdwg.mxu0
        %761 = vxpose.xlu0.b32.start [1/16] %v722, 128
        %762 = vxpose.xlu0.b32.cont [2/16] %v724, 128
        %763 = vxpose.xlu0.b32.cont [3/16] %v727, 128
        %764 = vxpose.xlu0.b32.cont [4/16] %v729, 128
        %765 = vxpose.xlu0.b32.cont [5/16] %v732, 128
        %766 = vxpose.xlu0.b32.cont [6/16] %v734, 128
        %767 = vxpose.xlu0.b32.cont [7/16] %v737, 128
        %768 = vxpose.xlu0.b32.cont [8/16] %v739, 128
        %769 = vxpose.xlu0.b32.cont [9/16] %v742, 128
        %770 = vxpose.xlu0.b32.cont [10/16] %v744, 128
        %771 = vxpose.xlu0.b32.cont [11/16] %v747, 128
        %772 = vxpose.xlu0.b32.cont [12/16] %v749, 128
        %773 = vxpose.xlu0.b32.cont [13/16] %v752, 128
        %774 = vxpose.xlu0.b32.cont [14/16] %v754, 128
        %775 = vxpose.xlu0.b32.cont [15/16] %v757, 128
        %776 = vxpose.xlu0.b32.end [16/16] %v759, 128
        %v777 = vpop.trf.xlu0
        %v778 = vpop.trf.xlu0
        %v779 = vpop.trf.xlu0
        %v780 = vpop.trf.xlu0
        %v781 = vpop.trf.xlu0
        %v782 = vpop.trf.xlu0
        %v783 = vpop.trf.xlu0
        %v784 = vpop.trf.xlu0
        %v785 = vpop.trf.xlu0
        %v786 = vpop.trf.xlu0
        %v787 = vpop.trf.xlu0
        %v788 = vpop.trf.xlu0
        %v789 = vpop.trf.xlu0
        %v790 = vpop.trf.xlu0
        %v791 = vpop.trf.xlu0
        %v792 = vpop.trf.xlu0
        %793 = vst [vmem:[%s190] sm:$0x1] %v777
        %s794 = sand.u32 %s115, 1
        %s795 = scalar_lea.sflag [#allocation3], %s794
        %s796 = sand.u32 %s115, 1
        %s797 = scalar_lea.vmem [#allocation2], %s796
        // Predicated region
        $region37: #{tpu_custom_call.1} parent=35 // pred_check
          %p798 = pneg %p125
        $region38: #{tpu_custom_call.1} parent=35 // pred_check_branch
          %800 = sbr.rel (%p798) target = $region40
        $region39: #{tpu_custom_call.1} parent=35 // pred_region
          %802 = vsyncadd %s795, 0
          %s803 = scalar_lea.hbm %s4, %s18
          %s805 = sshll.u32 %s797, 4
          %s806 = int_to_ptr.vmem [resolvable:$true] %s805
          %s807 = sshll.u32 %s803, 4
          %s808 = int_to_ptr.hbm [resolvable:$true] %s807
          %810 = dma.vmem_to_hbm [thread:$0]  %s806, 16, %s808, %s795
        $region40: #{tpu_custom_call.1} parent=35 // pred_fallthru
          _
      $region36: #{tpu_custom_call.1} parent=5 // pred_fallthru
        _
      %p811 = scmp.le.s32.totalorder 2, %s13
      // Predicated region
      $region41: #{tpu_custom_call.1} parent=5 // pred_check
        %p812 = pneg %p811
      $region42: #{tpu_custom_call.1} parent=5 // pred_check_branch
        %814 = sbr.rel (%p812) target = $region44
      $region43: #{tpu_custom_call.1} parent=5 // pred_region
        %s815 = ssub.s32 %s13, 2
        // Predicated region
        $region45: #{tpu_custom_call.1} parent=43 // pred_check
          %p816 = pneg %p131
        $region46: #{tpu_custom_call.1} parent=43 // pred_check_branch
          %818 = sbr.rel (%p816) target = $region48
        $region47: #{tpu_custom_call.1} parent=43 // pred_region
          %s819 = sand.u32 %s116, 1
          %s820 = scalar_lea.sflag [#allocation3], %s819
          %s821 = sand.u32 %s116, 1
          %s822 = scalar_lea.vmem [#allocation2], %s821
          %824 = dma.done %s820, 16
        $region48: #{tpu_custom_call.1} parent=43 // pred_fallthru
          _
      $region44: #{tpu_custom_call.1} parent=5 // pred_fallthru
        _
    $region6: #{tpu_custom_call.1} parent=1 // loop_footer
      %s17 = sadd.s32 1, %s13
    $region7: #{tpu_custom_call.1} parent=1 // loop_footer_branch
      %12 = sbr.rel target = $region3
    $region8: #{tpu_custom_call.1} parent=1 // loop_exit
      _
    %825 = vsyncpa [#allocation3], 1
    %s826 = scalar_lea.sflag [#allocation3], 1
    %827 = vsyncpa %s826, 1

</llo_original>
